<compile_context>
chip_gen: v7x
topology: tpu7x:2x2x1
jax: 0.10.0
libtpu: 0.0.40
codegen_flags: <defaults>
</compile_context>

<pallas_src>
import jax
import jax.numpy as jnp
from jax.experimental import pallas as pl
from jax.experimental.pallas import tpu as pltpu


def _film_kernel(x_ref, cond_ref, wg_ref, bg_ref, wb_ref, bb_ref, out_ref):
    # cond: (B, D); weights: (D, C); biases: (1, C); x/out block: (B, TN, C).
    cond = cond_ref[...]
    gamma = (jnp.dot(cond, wg_ref[...], preferred_element_type=jnp.float32)
             + bg_ref[...].astype(jnp.float32))                     # (B, C)
    beta = (jnp.dot(cond, wb_ref[...], preferred_element_type=jnp.float32)
            + bb_ref[...].astype(jnp.float32))                      # (B, C)
    x = x_ref[...].astype(jnp.float32)                              # (B, TN, C)
    out_ref[...] = (x * gamma[:, None, :] + beta[:, None, :]).astype(out_ref.dtype)


def film_forward(x, condition, params, mask=None, *, block_n=None):
    """FiLM forward. x: (B, N, C), condition: (B, D). Returns (B, N, C)."""
    del mask  # unused by the PyTorch module as well
    B, N, C = x.shape
    D = condition.shape[-1]
    wg, bg, wb, bb = params
    assert wg.shape == (D, C) and wb.shape == (D, C)

    if block_n is None:
        block_n = N if N <= 512 else 512
    if N % block_n != 0:
        block_n = N  # fall back to a single full-N block (keeps tiles aligned)
    grid = (N // block_n,)

    return pl.pallas_call(
        _film_kernel,
        out_shape=jax.ShapeDtypeStruct((B, N, C), x.dtype),
        grid=grid,
        in_specs=[
            pl.BlockSpec((B, block_n, C), lambda i: (0, i, 0)),   # x
            pl.BlockSpec((B, D), lambda i: (0, 0)),               # condition
            pl.BlockSpec((D, C), lambda i: (0, 0)),               # to_gamma weight
            pl.BlockSpec((1, C), lambda i: (0, 0)),               # to_gamma bias
            pl.BlockSpec((D, C), lambda i: (0, 0)),               # to_bias weight
            pl.BlockSpec((1, C), lambda i: (0, 0)),               # to_bias bias
        ],
        out_specs=pl.BlockSpec((B, block_n, C), lambda i: (0, i, 0)),
        compiler_params=pltpu.CompilerParams(dimension_semantics=("parallel",)),
    )(x, condition, wg, bg.reshape(1, C), wb, bb.reshape(1, C))


def film_reference(x, condition, params):
    """Pure-JAX reference mirroring the PyTorch forward."""
    wg, bg, wb, bb = params
    gamma = condition.astype(jnp.float32) @ wg.astype(jnp.float32) + bg.astype(jnp.float32)
    beta = condition.astype(jnp.float32) @ wb.astype(jnp.float32) + bb.astype(jnp.float32)
    out = x.astype(jnp.float32) * gamma[:, None, :] + beta[:, None, :]
    return out.astype(x.dtype)


if __name__ == "__main__":
    # Small, module-consistent shapes:
    #   x: (B, N, conditioned_dim), condition: (B, dim)
    B, N = 2, 8
    DIM, CONDITIONED_DIM = 32, 128  # condition dim, feature (lane-dense) dim

    key = jax.random.PRNGKey(0)
    ks = jax.random.split(key, 6)
    # PyTorch nn.Linear stores weight as (out, in); we keep (in, out) so the
    # kernel does a direct `cond @ W` matmul.
    wg = jax.random.normal(ks[0], (DIM, CONDITIONED_DIM), jnp.float32) * 0.05
    bg = jax.random.normal(ks[1], (CONDITIONED_DIM,), jnp.float32) * 0.05
    wb = jax.random.normal(ks[2], (DIM, CONDITIONED_DIM), jnp.float32) * 0.05
    bb = jax.random.normal(ks[3], (CONDITIONED_DIM,), jnp.float32) * 0.05
    params = (wg, bg, wb, bb)

    x = jax.random.normal(ks[4], (B, N, CONDITIONED_DIM), jnp.float32)
    condition = jax.random.normal(ks[5], (B, DIM), jnp.float32)

    out = film_forward(x, condition, params)
    out = jax.block_until_ready(out)

    ref = film_reference(x, condition, params)
    assert out.shape == (B, N, CONDITIONED_DIM)
    assert jnp.allclose(out, ref, atol=1e-5, rtol=1e-5), (
        f"max abs err {jnp.max(jnp.abs(out - ref))}")

    print("KERNEL_OK")
</pallas_src>

<mosaic_0001>
module attributes {stable_mosaic.version = 11 : i64} {
  func.func @_film_kernel(%arg0: i32, %arg1: memref<2x8x128xf32, #tpu.memory_space<vmem>>, %arg2: memref<2x32xf32, #tpu.memory_space<vmem>>, %arg3: memref<32x128xf32, #tpu.memory_space<vmem>>, %arg4: memref<1x128xf32, #tpu.memory_space<vmem>>, %arg5: memref<32x128xf32, #tpu.memory_space<vmem>>, %arg6: memref<1x128xf32, #tpu.memory_space<vmem>>, %arg7: memref<2x8x128xf32, #tpu.memory_space<vmem>>) attributes {dimension_semantics = [#tpu.dimension_semantics<parallel>], iteration_bounds = array<i64: 1>, scalar_prefetch = 0 : i64, scratch_operands = 0 : i64, tpu.core_type = #tpu.core_type<tc>, window_params = [{transform_indices = @transform_0, window_bounds = array<i64: 2, 8, 128>}, {pipeline_mode = #tpu.pipeline_mode<synchronous>, transform_indices = @transform_1, window_bounds = array<i64: 2, 32>}, {pipeline_mode = #tpu.pipeline_mode<synchronous>, transform_indices = @transform_2, window_bounds = array<i64: 32, 128>}, {pipeline_mode = #tpu.pipeline_mode<synchronous>, transform_indices = @transform_3, window_bounds = array<i64: 1, 128>}, {pipeline_mode = #tpu.pipeline_mode<synchronous>, transform_indices = @transform_4, window_bounds = array<i64: 32, 128>}, {pipeline_mode = #tpu.pipeline_mode<synchronous>, transform_indices = @transform_5, window_bounds = array<i64: 1, 128>}, {transform_indices = @transform_6, window_bounds = array<i64: 2, 8, 128>}]} {
    %c0 = arith.constant 0 : index
    %c0_0 = arith.constant 0 : index
    %0 = vector.load %arg2[%c0, %c0_0] : memref<2x32xf32, #tpu.memory_space<vmem>>, vector<2x32xf32>
    %c0_1 = arith.constant 0 : index
    %c0_2 = arith.constant 0 : index
    %1 = vector.load %arg3[%c0_1, %c0_2] : memref<32x128xf32, #tpu.memory_space<vmem>>, vector<32x128xf32>
    %cst = arith.constant dense<0.000000e+00> : vector<2x128xf32>
    %2 = tpu.matmul %0, %1, %cst {dimension_numbers = #tpu.dot_dimension_numbers<[1], [0], [0], [1], [0, 0, 1, 1], [], []>} : vector<2x32xf32>, vector<32x128xf32>, vector<2x128xf32> -> vector<2x128xf32>
    %c0_3 = arith.constant 0 : index
    %c0_4 = arith.constant 0 : index
    %3 = vector.load %arg4[%c0_3, %c0_4] : memref<1x128xf32, #tpu.memory_space<vmem>>, vector<1x128xf32>
    %4 = vector.broadcast %3 : vector<1x128xf32> to vector<2x128xf32>
    %5 = arith.addf %2, %4 : vector<2x128xf32>
    %c0_5 = arith.constant 0 : index
    %c0_6 = arith.constant 0 : index
    %6 = vector.load %arg5[%c0_5, %c0_6] : memref<32x128xf32, #tpu.memory_space<vmem>>, vector<32x128xf32>
    %cst_7 = arith.constant dense<0.000000e+00> : vector<2x128xf32>
    %7 = tpu.matmul %0, %6, %cst_7 {dimension_numbers = #tpu.dot_dimension_numbers<[1], [0], [0], [1], [0, 0, 1, 1], [], []>} : vector<2x32xf32>, vector<32x128xf32>, vector<2x128xf32> -> vector<2x128xf32>
    %c0_8 = arith.constant 0 : index
    %c0_9 = arith.constant 0 : index
    %8 = vector.load %arg6[%c0_8, %c0_9] : memref<1x128xf32, #tpu.memory_space<vmem>>, vector<1x128xf32>
    %9 = vector.broadcast %8 : vector<1x128xf32> to vector<2x128xf32>
    %10 = arith.addf %7, %9 : vector<2x128xf32>
    %c0_10 = arith.constant 0 : index
    %c0_11 = arith.constant 0 : index
    %c0_12 = arith.constant 0 : index
    %11 = vector.load %arg1[%c0_10, %c0_11, %c0_12] : memref<2x8x128xf32, #tpu.memory_space<vmem>>, vector<2x8x128xf32>
    %12 = vector.shape_cast %5 : vector<2x128xf32> to vector<2x1x128xf32>
    %13 = vector.broadcast %12 : vector<2x1x128xf32> to vector<2x8x128xf32>
    %14 = arith.mulf %11, %13 : vector<2x8x128xf32>
    %15 = vector.shape_cast %10 : vector<2x128xf32> to vector<2x1x128xf32>
    %16 = vector.broadcast %15 : vector<2x1x128xf32> to vector<2x8x128xf32>
    %17 = arith.addf %14, %16 : vector<2x8x128xf32>
    %c0_13 = arith.constant 0 : index
    %c0_14 = arith.constant 0 : index
    %c0_15 = arith.constant 0 : index
    %18 = vector.load %arg7[%c0_13, %c0_14, %c0_15] : memref<2x8x128xf32, #tpu.memory_space<vmem>>, vector<2x8x128xf32>
    tpu.vector_store %arg7[%c0_13, %c0_14, %c0_15], %17 {strides = array<i32>} : memref<2x8x128xf32, #tpu.memory_space<vmem>>, vector<2x8x128xf32>,
    return
  }
  func.func @transform_0(%arg0: i32) -> (i32, i32, i32) {
    %c0_i32 = arith.constant 0 : i32
    %c0_i32_0 = arith.constant 0 : i32
    %c0_i32_1 = arith.constant 0 : i32
    return %c0_i32, %arg0, %c0_i32_0 : i32, i32, i32
  }
  func.func @transform_1(%arg0: i32) -> (i32, i32) {
    %c0_i32 = arith.constant 0 : i32
    %c0_i32_0 = arith.constant 0 : i32
    %c0_i32_1 = arith.constant 0 : i32
    return %c0_i32, %c0_i32_0 : i32, i32
  }
  func.func @transform_2(%arg0: i32) -> (i32, i32) {
    %c0_i32 = arith.constant 0 : i32
    %c0_i32_0 = arith.constant 0 : i32
    %c0_i32_1 = arith.constant 0 : i32
    return %c0_i32, %c0_i32_0 : i32, i32
  }
  func.func @transform_3(%arg0: i32) -> (i32, i32) {
    %c0_i32 = arith.constant 0 : i32
    %c0_i32_0 = arith.constant 0 : i32
    %c0_i32_1 = arith.constant 0 : i32
    return %c0_i32, %c0_i32_0 : i32, i32
  }
  func.func @transform_4(%arg0: i32) -> (i32, i32) {
    %c0_i32 = arith.constant 0 : i32
    %c0_i32_0 = arith.constant 0 : i32
    %c0_i32_1 = arith.constant 0 : i32
    return %c0_i32, %c0_i32_0 : i32, i32
  }
  func.func @transform_5(%arg0: i32) -> (i32, i32) {
    %c0_i32 = arith.constant 0 : i32
    %c0_i32_0 = arith.constant 0 : i32
    %c0_i32_1 = arith.constant 0 : i32
    return %c0_i32, %c0_i32_0 : i32, i32
  }
  func.func @transform_6(%arg0: i32) -> (i32, i32, i32) {
    %c0_i32 = arith.constant 0 : i32
    %c0_i32_0 = arith.constant 0 : i32
    %c0_i32_1 = arith.constant 0 : i32
    return %c0_i32, %arg0, %c0_i32_0 : i32, i32, i32
  }
}

</mosaic_0001>

<llo_original>
// kernel: tpu_custom_call.1
$region0: #{tpu_custom_call.1}
  #allocation0 [shape = 'u32[]', space=smem, size = 0x4, offset = 0x4, fixed_abs, tag = 'smem constant byte address 0x4 - core index']
  #allocation1 [shape = 'u32[144,128]{1,0:T(1,128)}', space=vmem, size = 0x12000, scoped, tag = 'internal scratch']
  %s0 = inlined_call_operand.hbm [shape: f32[2,8,128], index: 0, kind: input, shape index: {}]
  %s1 = inlined_call_operand.vmem [shape: f32[2,32], index: 1, kind: input, shape index: {}]
  %s2 = inlined_call_operand.hbm [shape: f32[32,128], index: 2, kind: input, shape index: {}]
  %s3 = inlined_call_operand.vmem [shape: f32[1,128], index: 3, kind: input, shape index: {}]
  %s4 = inlined_call_operand.hbm [shape: f32[32,128], index: 4, kind: input, shape index: {}]
  %s5 = inlined_call_operand.vmem [shape: f32[1,128], index: 5, kind: input, shape index: {}]
  %s6 = inlined_call_operand.hbm [shape: f32[2,8,128], index: 6, kind: output, shape index: {}]
  %s7 = sld [smem:[#allocation0]]
  $region46: #{tpu_custom_call.1} parent=0
    _
  %s9 = ssub.s32 1, %s7
  %s10 = scalar_select 0, %s9, %s7
  $region1: #{tpu_custom_call.1} parent=0
    #allocation2 [shape = 'u8[8192]{0}', space=vmem, size = 0x2000, scoped, tag = 'input window, operand 0, single buffered']
    #allocation3 [shape = 's32[1]{0}', space=sflag, size = 0x4, scoped, tag = 'scoped memory for tpu_custom_call.1']
    #allocation4 [shape = 's32[1]{0}', space=sflag, size = 0x4, scoped, tag = 'scoped memory for tpu_custom_call.1']
    #allocation5 [shape = 'u8[16384]{0}', space=vmem, size = 0x4000, scoped, tag = 'input window, operand 2, single buffered']
    #allocation6 [shape = 's32[1]{0}', space=sflag, size = 0x4, scoped, tag = 'scoped memory for tpu_custom_call.1']
    #allocation7 [shape = 'u8[16384]{0}', space=vmem, size = 0x4000, scoped, tag = 'input window, operand 4, single buffered']
    #allocation8 [shape = 'u8[8192]{0}', space=vmem, size = 0x2000, scoped, tag = 'output window, operand 0, single buffered']
    %11 = vsyncpa [#allocation3], 0
    %12 = vsyncpa [#allocation6], 0
    %13 = vsyncpa [#allocation4], 0
    // Predicated region
    $region2: #{tpu_custom_call.1} parent=1 // pred_check
      _
    $region3: #{tpu_custom_call.1} parent=1 // pred_check_branch
      %15 = sbr.rel (0) target = $region5
    $region4: #{tpu_custom_call.1} parent=1 // pred_region
      %s17 = ssub.s32 256, 256
      %18 = vsyncadd [#allocation3], %s17
      %s19 = sshll.u32 [#allocation2], 4
      %s20 = int_to_ptr.vmem [resolvable:$true] %s19
      %25 = dma.hbm_to_vmem [thread:$0]  %s0, 256, %s20, [#allocation3], 128, 128, 8
    $region5: #{tpu_custom_call.1} parent=1 // pred_fallthru
      _
    // Predicated region
    $region6: #{tpu_custom_call.1} parent=1 // pred_check
      _
    $region7: #{tpu_custom_call.1} parent=1 // pred_check_branch
      %27 = sbr.rel (0) target = $region9
    $region8: #{tpu_custom_call.1} parent=1 // pred_region
      _
    $region9: #{tpu_custom_call.1} parent=1 // pred_fallthru
      _
    // Predicated region
    $region10: #{tpu_custom_call.1} parent=1 // pred_check
      _
    $region11: #{tpu_custom_call.1} parent=1 // pred_check_branch
      %29 = sbr.rel (0) target = $region13
    $region12: #{tpu_custom_call.1} parent=1 // pred_region
      %s31 = ssub.s32 512, 512
      %32 = vsyncadd [#allocation6], %s31
      %s33 = sshll.u32 [#allocation5], 4
      %s34 = int_to_ptr.vmem [resolvable:$true] %s33
      %39 = dma.hbm_to_vmem [thread:$0]  %s2, 512, %s34, [#allocation6], 128, 128, 8
    $region13: #{tpu_custom_call.1} parent=1 // pred_fallthru
      _
    // Predicated region
    $region14: #{tpu_custom_call.1} parent=1 // pred_check
      _
    $region15: #{tpu_custom_call.1} parent=1 // pred_check_branch
      %41 = sbr.rel (0) target = $region17
    $region16: #{tpu_custom_call.1} parent=1 // pred_region
      _
    $region17: #{tpu_custom_call.1} parent=1 // pred_fallthru
      _
    // Predicated region
    $region18: #{tpu_custom_call.1} parent=1 // pred_check
      _
    $region19: #{tpu_custom_call.1} parent=1 // pred_check_branch
      %43 = sbr.rel (0) target = $region21
    $region20: #{tpu_custom_call.1} parent=1 // pred_region
      %s45 = ssub.s32 512, 512
      %46 = vsyncadd [#allocation6], %s45
      %s47 = sshll.u32 [#allocation7], 4
      %s48 = int_to_ptr.vmem [resolvable:$true] %s47
      %53 = dma.hbm_to_vmem [thread:$0]  %s4, 512, %s48, [#allocation6], 128, 128, 8
    $region21: #{tpu_custom_call.1} parent=1 // pred_fallthru
      _
    // Predicated region
    $region22: #{tpu_custom_call.1} parent=1 // pred_check
      _
    $region23: #{tpu_custom_call.1} parent=1 // pred_check_branch
      %55 = sbr.rel (0) target = $region25
    $region24: #{tpu_custom_call.1} parent=1 // pred_region
      _
    $region25: #{tpu_custom_call.1} parent=1 // pred_fallthru
      _
    // Predicated region
    $region26: #{tpu_custom_call.1} parent=1 // pred_check
      _
    $region27: #{tpu_custom_call.1} parent=1 // pred_check_branch
      %57 = sbr.rel (0) target = $region29
    $region28: #{tpu_custom_call.1} parent=1 // pred_region
      %58 = dma.done [#allocation3], 256
    $region29: #{tpu_custom_call.1} parent=1 // pred_fallthru
      _
    // Predicated region
    $region30: #{tpu_custom_call.1} parent=1 // pred_check
      _
    $region31: #{tpu_custom_call.1} parent=1 // pred_check_branch
      %60 = sbr.rel (0) target = $region33
    $region32: #{tpu_custom_call.1} parent=1 // pred_region
      %61 = dma.done [#allocation6], 512
    $region33: #{tpu_custom_call.1} parent=1 // pred_fallthru
      _
    // Predicated region
    $region34: #{tpu_custom_call.1} parent=1 // pred_check
      _
    $region35: #{tpu_custom_call.1} parent=1 // pred_check_branch
      %63 = sbr.rel (0) target = $region37
    $region36: #{tpu_custom_call.1} parent=1 // pred_region
      %64 = dma.done [#allocation6], 512
    $region37: #{tpu_custom_call.1} parent=1 // pred_fallthru
      _
    %v65 = vld [vmem:[%s1] sm:$0x3]
    %v66 = vld [vmem:[#allocation5] sm:$0xff]
    %v67 = vld [vmem:[#allocation5 + $0x8] sm:$0xff]
    %v68 = vld [vmem:[#allocation5 + $0x10] sm:$0xff]
    %v69 = vld [vmem:[#allocation5 + $0x18] sm:$0xff]
    %v70 = vld [vmem:[%s3] sm:$0x1]
    %v72 = vlaneseq
    %v73 = vshrl.u32 %v72, 7
    %v74 = vsub.s32 0, %v73
    %v75 = vrot.slane %v70, %v74
    %vm77 = vcmask 261120
    %v79 = vsel %vm77, %v65, 0
    %81 = vmatprep.subr.mxu0 0.0
    %82 = vmatpush1.msra.mxu0 %v66
    %83 = vmatprep.subr.mxu0 0.0
    %84 = vmatpush1.msra.mxu0 %v67
    %85 = vmatprep.subr.mxu0 0.0
    %86 = vmatpush1.msra.mxu0 %v68
    %87 = vmatprep.subr.mxu0 0.0
    %88 = vmatpush1.msra.mxu0 %v69
    %89 = vmatprep.subr.mxu0 0.0
    %90 = vmatpush1.msra.mxu0 0.0
    %91 = vmatprep.subr.mxu0 0.0
    %92 = vmatpush1.msra.mxu0 0.0
    %93 = vmatprep.subr.mxu0 0.0
    %94 = vmatpush1.msra.mxu0 0.0
    %95 = vmatprep.subr.mxu0 0.0
    %96 = vmatpush1.msra.mxu0 0.0
    %97 = vmatprep.subr.mxu0 0.0
    %98 = vmatpush1.msra.mxu0 0.0
    %99 = vmatprep.subr.mxu0 0.0
    %100 = vmatpush1.msra.mxu0 0.0
    %101 = vmatprep.subr.mxu0 0.0
    %102 = vmatpush1.msra.mxu0 0.0
    %103 = vmatprep.subr.mxu0 0.0
    %104 = vmatpush1.msra.mxu0 0.0
    %105 = vmatprep.subr.mxu0 0.0
    %106 = vmatpush1.msra.mxu0 0.0
    %107 = vmatprep.subr.mxu0 0.0
    %108 = vmatpush1.msra.mxu0 0.0
    %109 = vmatprep.subr.mxu0 0.0
    %110 = vmatpush1.msra.mxu0 0.0
    %111 = vmatprep.subr.mxu0 0.0
    %112 = vmatpush1.msra.mxu0 0.0
    %113 = vmatprep.subr.mxu0 0.0
    %114 = vmatpush1.msra.mxu0 0.0
    %115 = vmatprep.subr.mxu0 0.0
    %116 = vmatpush1.msra.mxu0 0.0
    %117 = vmatprep.subr.mxu0 0.0
    %118 = vmatpush1.msra.mxu0 0.0
    %119 = vmatprep.subr.mxu0 0.0
    %120 = vmatpush1.msra.mxu0 0.0
    %121 = vmatprep.subr.mxu0 0.0
    %122 = vmatpush1.msra.mxu0 0.0
    %123 = vmatprep.subr.mxu0 0.0
    %124 = vmatpush1.msra.mxu0 0.0
    %125 = vmatprep.subr.mxu0 0.0
    %126 = vmatpush1.msra.mxu0 0.0
    %127 = vmatprep.subr.mxu0 0.0
    %128 = vmatpush1.msra.mxu0 0.0
    %129 = vmatprep.subr.mxu0 0.0
    %130 = vmatpush1.msra.mxu0 0.0
    %131 = vmatprep.subr.mxu0 0.0
    %132 = vmatpush1.msra.mxu0 0.0
    %133 = vmatprep.subr.mxu0 0.0
    %134 = vmatpush1.msra.mxu0 0.0
    %135 = vmatprep.subr.mxu0 0.0
    %136 = vmatpush1.msra.mxu0 0.0
    %137 = vmatprep.subr.mxu0 0.0
    %138 = vmatpush1.msra.mxu0 0.0
    %139 = vmatprep.subr.mxu0 0.0
    %140 = vmatpush1.msra.mxu0 0.0
    %141 = vmatprep.subr.mxu0 0.0
    %142 = vmatpush1.msra.mxu0 0.0
    %143 = vmatprep.subr.mxu0 0.0
    %144 = vmatpush1.msra.mxu0 0.0
    %145 = vmatprep.mubr.f32.mxu0 0.0
    %146 = vmatmul.mubr.f32.gmra.mrb[0].mxu0 %v79
    %v147 = vpop.f32.mrb[0].mxu0
    %v148 = vadd.f32 %v75, %v147
    %v149 = vpop.f32.mrb[0].mxu0
    %150 = vdwg.mxu0
    %v151 = vld [vmem:[#allocation7] sm:$0xff]
    %v152 = vld [vmem:[#allocation7 + $0x8] sm:$0xff]
    %v153 = vld [vmem:[#allocation7 + $0x10] sm:$0xff]
    %v154 = vld [vmem:[#allocation7 + $0x18] sm:$0xff]
    %v155 = vld [vmem:[%s5] sm:$0x1]
    %v157 = vlaneseq
    %v158 = vshrl.u32 %v157, 7
    %v159 = vsub.s32 0, %v158
    %v160 = vrot.slane %v155, %v159
    %162 = vmatprep.subr.mxu0 0.0
    %163 = vmatpush1.msra.mxu0 %v151
    %164 = vmatprep.subr.mxu0 0.0
    %165 = vmatpush1.msra.mxu0 %v152
    %166 = vmatprep.subr.mxu0 0.0
    %167 = vmatpush1.msra.mxu0 %v153
    %168 = vmatprep.subr.mxu0 0.0
    %169 = vmatpush1.msra.mxu0 %v154
    %170 = vmatprep.subr.mxu0 0.0
    %171 = vmatpush1.msra.mxu0 0.0
    %172 = vmatprep.subr.mxu0 0.0
    %173 = vmatpush1.msra.mxu0 0.0
    %174 = vmatprep.subr.mxu0 0.0
    %175 = vmatpush1.msra.mxu0 0.0
    %176 = vmatprep.subr.mxu0 0.0
    %177 = vmatpush1.msra.mxu0 0.0
    %178 = vmatprep.subr.mxu0 0.0
    %179 = vmatpush1.msra.mxu0 0.0
    %180 = vmatprep.subr.mxu0 0.0
    %181 = vmatpush1.msra.mxu0 0.0
    %182 = vmatprep.subr.mxu0 0.0
    %183 = vmatpush1.msra.mxu0 0.0
    %184 = vmatprep.subr.mxu0 0.0
    %185 = vmatpush1.msra.mxu0 0.0
    %186 = vmatprep.subr.mxu0 0.0
    %187 = vmatpush1.msra.mxu0 0.0
    %188 = vmatprep.subr.mxu0 0.0
    %189 = vmatpush1.msra.mxu0 0.0
    %190 = vmatprep.subr.mxu0 0.0
    %191 = vmatpush1.msra.mxu0 0.0
    %192 = vmatprep.subr.mxu0 0.0
    %193 = vmatpush1.msra.mxu0 0.0
    %194 = vmatprep.subr.mxu0 0.0
    %195 = vmatpush1.msra.mxu0 0.0
    %196 = vmatprep.subr.mxu0 0.0
    %197 = vmatpush1.msra.mxu0 0.0
    %198 = vmatprep.subr.mxu0 0.0
    %199 = vmatpush1.msra.mxu0 0.0
    %200 = vmatprep.subr.mxu0 0.0
    %201 = vmatpush1.msra.mxu0 0.0
    %202 = vmatprep.subr.mxu0 0.0
    %203 = vmatpush1.msra.mxu0 0.0
    %204 = vmatprep.subr.mxu0 0.0
    %205 = vmatpush1.msra.mxu0 0.0
    %206 = vmatprep.subr.mxu0 0.0
    %207 = vmatpush1.msra.mxu0 0.0
    %208 = vmatprep.subr.mxu0 0.0
    %209 = vmatpush1.msra.mxu0 0.0
    %210 = vmatprep.subr.mxu0 0.0
    %211 = vmatpush1.msra.mxu0 0.0
    %212 = vmatprep.subr.mxu0 0.0
    %213 = vmatpush1.msra.mxu0 0.0
    %214 = vmatprep.subr.mxu0 0.0
    %215 = vmatpush1.msra.mxu0 0.0
    %216 = vmatprep.subr.mxu0 0.0
    %217 = vmatpush1.msra.mxu0 0.0
    %218 = vmatprep.subr.mxu0 0.0
    %219 = vmatpush1.msra.mxu0 0.0
    %220 = vmatprep.subr.mxu0 0.0
    %221 = vmatpush1.msra.mxu0 0.0
    %222 = vmatprep.subr.mxu0 0.0
    %223 = vmatpush1.msra.mxu0 0.0
    %224 = vmatprep.subr.mxu0 0.0
    %225 = vmatpush1.msra.mxu0 0.0
    %226 = vmatprep.mubr.f32.mxu0 0.0
    %227 = vmatmul.mubr.f32.gmra.mrb[0].mxu0 %v79
    %v228 = vpop.f32.mrb[0].mxu0
    %v229 = vadd.f32 %v160, %v228
    %v230 = vpop.f32.mrb[0].mxu0
    %231 = vdwg.mxu0
    %v232 = vld [vmem:[#allocation2] sm:$0xff]
    %v233 = vld [vmem:[#allocation2 + $0x8] sm:$0xff]
    %v236 = vunpack.c.l.s4 1966171168
    %v237 = vunpack.c.0.s8 %v236
    %v238 = vlaneseq
    %v239 = vshrl.u32 %v238, 7
    %v240 = vsub.s32 %v237, %v239
    %v241 = vrot.slane %v148, %v240
    %v242 = vcombine.high %v241, %v241
    %v244 = vunpack.c.l.s4 1966171168
    %v245 = vunpack.c.0.s8 %v244
    %v246 = vlaneseq
    %v247 = vshrl.u32 %v246, 7
    %v248 = vsub.s32 %v245, %v247
    %v249 = vrot.slane %v241, %v248
    %v251 = vunpack.c.l.s4 1966171168
    %v252 = vunpack.c.0.s8 %v251
    %v253 = vlaneseq
    %v254 = vshrl.u32 %v253, 7
    %v255 = vsub.s32 %v252, %v254
    %v256 = vrot.slane %v242, %v255
    %v257 = vlaneseq
    %v258 = vshrl.u32 %v257, 7
    %v259 = vsub.s32 0, %v258
    %v260 = vrot.slane %v249, %v259
    %v261 = vlaneseq
    %v262 = vshrl.u32 %v261, 7
    %v263 = vsub.s32 0, %v262
    %v264 = vrot.slane %v256, %v263
    %v267 = vmul.f32 %v232, %v260
    %v268 = vmul.f32 %v233, %v264
    %v271 = vunpack.c.l.s4 1966171168
    %v272 = vunpack.c.0.s8 %v271
    %v273 = vlaneseq
    %v274 = vshrl.u32 %v273, 7
    %v275 = vsub.s32 %v272, %v274
    %v276 = vrot.slane %v229, %v275
    %v277 = vcombine.high %v276, %v276
    %v279 = vunpack.c.l.s4 1966171168
    %v280 = vunpack.c.0.s8 %v279
    %v281 = vlaneseq
    %v282 = vshrl.u32 %v281, 7
    %v283 = vsub.s32 %v280, %v282
    %v284 = vrot.slane %v276, %v283
    %v286 = vunpack.c.l.s4 1966171168
    %v287 = vunpack.c.0.s8 %v286
    %v288 = vlaneseq
    %v289 = vshrl.u32 %v288, 7
    %v290 = vsub.s32 %v287, %v289
    %v291 = vrot.slane %v277, %v290
    %v292 = vlaneseq
    %v293 = vshrl.u32 %v292, 7
    %v294 = vsub.s32 0, %v293
    %v295 = vrot.slane %v284, %v294
    %v296 = vlaneseq
    %v297 = vshrl.u32 %v296, 7
    %v298 = vsub.s32 0, %v297
    %v299 = vrot.slane %v291, %v298
    %v302 = vadd.f32 %v267, %v295
    %v303 = vadd.f32 %v268, %v299
    %304 = vst [vmem:[#allocation8] sm:$0xff] %v302
    %305 = vst [vmem:[#allocation8 + $0x8] sm:$0xff] %v303
    // Predicated region
    $region38: #{tpu_custom_call.1} parent=1 // pred_check
      _
    $region39: #{tpu_custom_call.1} parent=1 // pred_check_branch
      %307 = sbr.rel (0) target = $region41
    $region40: #{tpu_custom_call.1} parent=1 // pred_region
      %s309 = ssub.s32 256, 256
      %310 = vsyncadd [#allocation4], %s309
      %s311 = sshll.u32 [#allocation8], 4
      %s312 = int_to_ptr.vmem [resolvable:$true] %s311
      %317 = dma.vmem_to_hbm [thread:$0]  %s312, 256, %s6, [#allocation4], 128, 128, 8
    $region41: #{tpu_custom_call.1} parent=1 // pred_fallthru
      _
    // Predicated region
    $region42: #{tpu_custom_call.1} parent=1 // pred_check
      _
    $region43: #{tpu_custom_call.1} parent=1 // pred_check_branch
      %319 = sbr.rel (0) target = $region45
    $region44: #{tpu_custom_call.1} parent=1 // pred_region
      %320 = dma.done [#allocation4], 256
    $region45: #{tpu_custom_call.1} parent=1 // pred_fallthru
      _
    %321 = vsyncpa [#allocation3], 1
    %322 = vsyncpa [#allocation6], 1
    %323 = vsyncpa [#allocation4], 1

</llo_original>
